<compile_context>
chip_gen: v6e
topology: v6e:2x2x1
jax: 0.10.0
libtpu: 0.0.40
codegen_flags: <defaults>
</compile_context>

<pallas_src>
import functools

import jax
import jax.numpy as jnp
from jax.experimental import pallas as pl
from jax.experimental.pallas import tpu as pltpu


def _round_up(n, m):
    return ((n + m - 1) // m) * m


def _leaky_relu(x, slope=0.01):
    return jnp.where(x > 0, x, slope * x)


def mlp_kernel(x_ref, w1_ref, b1_ref, w2_ref, b2_ref, w3_ref, b3_ref, o_ref):
    # x_ref: (TILE_B, 228) f32; weights are padded/aligned; o_ref: (1, TILE_B).
    x = x_ref[...]

    h1 = jnp.dot(x, w1_ref[...], preferred_element_type=jnp.float32) + b1_ref[...]
    h1 = _leaky_relu(h1)                                        # (TILE_B, 128)

    h2 = jnp.dot(h1, w2_ref[...], preferred_element_type=jnp.float32) + b2_ref[...]
    h2 = _leaky_relu(h2)                                        # (TILE_B, 128)

    # Layer 3: contract the feature axis of h2 against the (padded) w3 row so the
    # result is lane-dense along the batch: (8, 128) x (TILE_B, 128)^T -> (8, TILE_B).
    out_rows = jax.lax.dot_general(
        w3_ref[...], h2,
        dimension_numbers=(((1,), (1,)), ((), ())),
        preferred_element_type=jnp.float32)                     # (8, TILE_B)

    o_ref[...] = (out_rows[0:1, :] + b3_ref[0, 0]).astype(o_ref.dtype)


def prepare_params(params):
    """Zero-pad weights to 128-aligned output dims; done once, outside the hot path."""
    w1, b1, w2, b2, w3, b3 = params
    d_in, h1 = w1.shape            # 228, 100
    _, h2 = w2.shape               # 100, 10
    H1 = _round_up(h1, 128)        # 128
    H2 = _round_up(h2, 128)        # 128
    w1p = jnp.zeros((d_in, H1), jnp.float32).at[:, :h1].set(w1)
    b1p = jnp.zeros((1, H1), jnp.float32).at[:, :h1].set(b1.reshape(1, h1))
    w2p = jnp.zeros((H1, H2), jnp.float32).at[:h1, :h2].set(w2)
    b2p = jnp.zeros((1, H2), jnp.float32).at[:, :h2].set(b2.reshape(1, h2))
    # w3 (10, 1) stored as an 8x128 row block (row 0 holds w3[:, 0]); padded rows/cols zero.
    w3p = jnp.zeros((8, H2), jnp.float32).at[0, :h2].set(w3[:, 0])
    b3p = jnp.asarray(b3, jnp.float32).reshape(1, 1)
    return (w1p, b1p, w2p, b2p, w3p, b3p)


@functools.partial(jax.jit, static_argnames=("max_tile_b",))
def feedforward_nn(x, padded_params, *, max_tile_b=1024):
    """x: (B, 228) float32. padded_params: output of prepare_params. Returns (B, 1)."""
    w1p, b1p, w2p, b2p, w3p, b3p = padded_params
    B, F = x.shape

    # Batch tile: multiple of 128 (lane-dense output slab), capped for VMEM headroom.
    tile_b = max(128, min(max_tile_b, _round_up(B, 128)))
    b_pad = _round_up(B, tile_b)
    if b_pad != B:
        x = jnp.pad(x, ((0, b_pad - B), (0, 0)))
    num_tiles = b_pad // tile_b

    out = pl.pallas_call(
        mlp_kernel,
        out_shape=jax.ShapeDtypeStruct((1, b_pad), jnp.float32),
        grid=(num_tiles,),
        in_specs=[
            # Streamed, double-buffered x tiles.
            pl.BlockSpec((tile_b, F), lambda i: (i, 0)),
            # Weights/biases: full blocks, constant index_map -> fetched once, stay in VMEM.
            pl.BlockSpec(w1p.shape, lambda i: (0, 0)),
            pl.BlockSpec(b1p.shape, lambda i: (0, 0)),
            pl.BlockSpec(w2p.shape, lambda i: (0, 0)),
            pl.BlockSpec(b2p.shape, lambda i: (0, 0)),
            pl.BlockSpec(w3p.shape, lambda i: (0, 0)),
            # Scalar bias of the last layer lives in SMEM.
            pl.BlockSpec(memory_space=pltpu.MemorySpace.SMEM),
        ],
        # Lane-dense output: one (1, TILE_B) slab per grid step.
        out_specs=pl.BlockSpec((1, tile_b), lambda i: (0, i)),
        compiler_params=pltpu.CompilerParams(
            dimension_semantics=("parallel",)),
    )(x, w1p, b1p, w2p, b2p, w3p, b3p)

    return out[0, :B].reshape(B, 1)


def init_params(key):
    """Deterministic init mimicking PyTorch nn.Linear default:
    U(-1/sqrt(fan_in), 1/sqrt(fan_in)) for both weight and bias."""
    dims = [(228, 100), (100, 10), (10, 1)]
    params = []
    for (fan_in, fan_out) in dims:
        key, kw, kb = jax.random.split(key, 3)
        bound = 1.0 / (fan_in ** 0.5)
        w = jax.random.uniform(kw, (fan_in, fan_out), jnp.float32, -bound, bound)
        b = jax.random.uniform(kb, (1, fan_out), jnp.float32, -bound, bound)
        params.extend([w, b])
    return tuple(params)


def reference_forward(x, params):
    w1, b1, w2, b2, w3, b3 = params
    h = jax.nn.leaky_relu(x @ w1 + b1, negative_slope=0.01)
    h = jax.nn.leaky_relu(h @ w2 + b2, negative_slope=0.01)
    return h @ w3 + b3


if __name__ == "__main__":
    key = jax.random.PRNGKey(0)
    kx, kp = jax.random.split(key)

    B = 8
    x = jax.random.normal(kx, (B, 228), dtype=jnp.float32)
    params = init_params(kp)
    padded_params = prepare_params(params)

    out = feedforward_nn(x, padded_params)
    out = jax.block_until_ready(out)

    ref = reference_forward(x, params)
    assert out.shape == (B, 1), out.shape
    assert jnp.allclose(out, ref, atol=1e-4, rtol=1e-4), "mismatch vs reference"

    print("KERNEL_OK")
</pallas_src>

<mosaic_0001>
module attributes {stable_mosaic.version = 11 : i64} {
  func.func @mlp_kernel(%arg0: i32, %arg1: memref<128x228xf32, #tpu.memory_space<vmem>>, %arg2: memref<228x128xf32, #tpu.memory_space<vmem>>, %arg3: memref<1x128xf32, #tpu.memory_space<vmem>>, %arg4: memref<128x128xf32, #tpu.memory_space<vmem>>, %arg5: memref<1x128xf32, #tpu.memory_space<vmem>>, %arg6: memref<8x128xf32, #tpu.memory_space<vmem>>, %arg7: memref<1x1xf32, #tpu.memory_space<smem>>, %arg8: memref<1x128xf32, #tpu.memory_space<vmem>>) attributes {dimension_semantics = [#tpu.dimension_semantics<parallel>], iteration_bounds = array<i64: 1>, scalar_prefetch = 0 : i64, scratch_operands = 0 : i64, tpu.core_type = #tpu.core_type<tc>, window_params = [{transform_indices = @transform_0, window_bounds = array<i64: 128, 228>}, {pipeline_mode = #tpu.pipeline_mode<synchronous>, transform_indices = @transform_1, window_bounds = array<i64: 228, 128>}, {pipeline_mode = #tpu.pipeline_mode<synchronous>, transform_indices = @transform_2, window_bounds = array<i64: 1, 128>}, {pipeline_mode = #tpu.pipeline_mode<synchronous>, transform_indices = @transform_3, window_bounds = array<i64: 128, 128>}, {pipeline_mode = #tpu.pipeline_mode<synchronous>, transform_indices = @transform_4, window_bounds = array<i64: 1, 128>}, {pipeline_mode = #tpu.pipeline_mode<synchronous>, transform_indices = @transform_5, window_bounds = array<i64: 8, 128>}, {transform_indices = @transform_6, window_bounds = array<i64: 1, 1>}, {transform_indices = @transform_7, window_bounds = array<i64: 1, 128>}]} {
    %c0 = arith.constant 0 : index
    %c0_0 = arith.constant 0 : index
    %0 = vector.load %arg1[%c0, %c0_0] : memref<128x228xf32, #tpu.memory_space<vmem>>, vector<128x228xf32>
    %c0_1 = arith.constant 0 : index
    %c0_2 = arith.constant 0 : index
    %1 = vector.load %arg2[%c0_1, %c0_2] : memref<228x128xf32, #tpu.memory_space<vmem>>, vector<228x128xf32>
    %cst = arith.constant dense<0.000000e+00> : vector<128x128xf32>
    %2 = tpu.matmul %0, %1, %cst {dimension_numbers = #tpu.dot_dimension_numbers<[1], [0], [0], [1], [0, 0, 1, 1], [], []>} : vector<128x228xf32>, vector<228x128xf32>, vector<128x128xf32> -> vector<128x128xf32>
    %c0_3 = arith.constant 0 : index
    %c0_4 = arith.constant 0 : index
    %3 = vector.load %arg3[%c0_3, %c0_4] : memref<1x128xf32, #tpu.memory_space<vmem>>, vector<1x128xf32>
    %4 = vector.broadcast %3 : vector<1x128xf32> to vector<128x128xf32>
    %5 = arith.addf %2, %4 : vector<128x128xf32>
    %cst_5 = arith.constant 0.000000e+00 : f32
    %6 = vector.broadcast %cst_5 : f32 to vector<128x128xf32>
    %7 = arith.cmpf ogt, %5, %6 : vector<128x128xf32>
    %cst_6 = arith.constant 0.00999999977 : f32
    %8 = vector.broadcast %cst_6 : f32 to vector<128x128xf32>
    %9 = arith.mulf %8, %5 : vector<128x128xf32>
    %10 = arith.select %7, %5, %9 : vector<128x128xi1>, vector<128x128xf32>
    %c0_7 = arith.constant 0 : index
    %c0_8 = arith.constant 0 : index
    %11 = vector.load %arg4[%c0_7, %c0_8] : memref<128x128xf32, #tpu.memory_space<vmem>>, vector<128x128xf32>
    %cst_9 = arith.constant dense<0.000000e+00> : vector<128x128xf32>
    %12 = tpu.matmul %10, %11, %cst_9 {dimension_numbers = #tpu.dot_dimension_numbers<[1], [0], [0], [1], [0, 0, 1, 1], [], []>} : vector<128x128xf32>, vector<128x128xf32>, vector<128x128xf32> -> vector<128x128xf32>
    %c0_10 = arith.constant 0 : index
    %c0_11 = arith.constant 0 : index
    %13 = vector.load %arg5[%c0_10, %c0_11] : memref<1x128xf32, #tpu.memory_space<vmem>>, vector<1x128xf32>
    %14 = vector.broadcast %13 : vector<1x128xf32> to vector<128x128xf32>
    %15 = arith.addf %12, %14 : vector<128x128xf32>
    %cst_12 = arith.constant 0.000000e+00 : f32
    %16 = vector.broadcast %cst_12 : f32 to vector<128x128xf32>
    %17 = arith.cmpf ogt, %15, %16 : vector<128x128xf32>
    %cst_13 = arith.constant 0.00999999977 : f32
    %18 = vector.broadcast %cst_13 : f32 to vector<128x128xf32>
    %19 = arith.mulf %18, %15 : vector<128x128xf32>
    %20 = arith.select %17, %15, %19 : vector<128x128xi1>, vector<128x128xf32>
    %c0_14 = arith.constant 0 : index
    %c0_15 = arith.constant 0 : index
    %21 = vector.load %arg6[%c0_14, %c0_15] : memref<8x128xf32, #tpu.memory_space<vmem>>, vector<8x128xf32>
    %cst_16 = arith.constant dense<0.000000e+00> : vector<8x128xf32>
    %22 = tpu.matmul %21, %20, %cst_16 {dimension_numbers = #tpu.dot_dimension_numbers<[1], [1], [0], [0], [0, 0, 1, 0], [], []>} : vector<8x128xf32>, vector<128x128xf32>, vector<8x128xf32> -> vector<8x128xf32>
    %23 = vector.extract_strided_slice %22 {offsets = [0, 0], sizes = [1, 128], strides = [1, 1]} : vector<8x128xf32> to vector<1x128xf32>
    %c0_17 = arith.constant 0 : index
    %c0_18 = arith.constant 0 : index
    %24 = memref.load %arg7[%c0_17, %c0_18] : memref<1x1xf32, #tpu.memory_space<smem>>
    %25 = vector.broadcast %24 : f32 to vector<1x128xf32>
    %26 = arith.addf %23, %25 : vector<1x128xf32>
    %c0_19 = arith.constant 0 : index
    %c0_20 = arith.constant 0 : index
    %27 = vector.load %arg8[%c0_19, %c0_20] : memref<1x128xf32, #tpu.memory_space<vmem>>, vector<1x128xf32>
    tpu.vector_store %arg8[%c0_19, %c0_20], %26 {strides = array<i32>} : memref<1x128xf32, #tpu.memory_space<vmem>>, vector<1x128xf32>,
    return
  }
  func.func @transform_0(%arg0: i32) -> (i32, i32) {
    %c0_i32 = arith.constant 0 : i32
    %c0_i32_0 = arith.constant 0 : i32
    return %arg0, %c0_i32 : i32, i32
  }
  func.func @transform_1(%arg0: i32) -> (i32, i32) {
    %c0_i32 = arith.constant 0 : i32
    %c0_i32_0 = arith.constant 0 : i32
    %c0_i32_1 = arith.constant 0 : i32
    return %c0_i32, %c0_i32_0 : i32, i32
  }
  func.func @transform_2(%arg0: i32) -> (i32, i32) {
    %c0_i32 = arith.constant 0 : i32
    %c0_i32_0 = arith.constant 0 : i32
    %c0_i32_1 = arith.constant 0 : i32
    return %c0_i32, %c0_i32_0 : i32, i32
  }
  func.func @transform_3(%arg0: i32) -> (i32, i32) {
    %c0_i32 = arith.constant 0 : i32
    %c0_i32_0 = arith.constant 0 : i32
    %c0_i32_1 = arith.constant 0 : i32
    return %c0_i32, %c0_i32_0 : i32, i32
  }
  func.func @transform_4(%arg0: i32) -> (i32, i32) {
    %c0_i32 = arith.constant 0 : i32
    %c0_i32_0 = arith.constant 0 : i32
    %c0_i32_1 = arith.constant 0 : i32
    return %c0_i32, %c0_i32_0 : i32, i32
  }
  func.func @transform_5(%arg0: i32) -> (i32, i32) {
    %c0_i32 = arith.constant 0 : i32
    %c0_i32_0 = arith.constant 0 : i32
    %c0_i32_1 = arith.constant 0 : i32
    return %c0_i32, %c0_i32_0 : i32, i32
  }
  func.func @transform_6(%arg0: i32) -> (i32, i32) {
    %c0_i32 = arith.constant 0 : i32
    %c0_i32_0 = arith.constant 0 : i32
    %c0_i32_1 = arith.constant 0 : i32
    return %c0_i32, %c0_i32_0 : i32, i32
  }
  func.func @transform_7(%arg0: i32) -> (i32, i32) {
    %c0_i32 = arith.constant 0 : i32
    %c0_i32_0 = arith.constant 0 : i32
    return %c0_i32, %arg0 : i32, i32
  }
}

</mosaic_0001>

<llo_original>
// kernel: feedforward_nn.1
$region0: #{feedforward_nn.1}
  #allocation0 [shape = 'u32[]', space=smem, size = 0x4, offset = 0x4, fixed_abs, tag = 'smem constant byte address 0x4 - core index']
  #allocation1 [shape = 'u32[144,128]{1,0:T(1,128)}', space=vmem, size = 0x12000, scoped, tag = 'internal scratch']
  #allocation2 [shape = 'f32[1,1]{1,0:T(1,128)S(6)}', space=smem, size = 0x200, scoped, tag = 'scoped memory for feedforward_nn.1']
  %s0 = inlined_call_operand.vmem [shape: f32[128,228], index: 0, kind: input, shape index: {}]
  %s1 = inlined_call_operand.vmem [shape: f32[228,128], index: 1, kind: input, shape index: {}]
  %s2 = inlined_call_operand.vmem [shape: f32[1,128], index: 2, kind: input, shape index: {}]
  %s3 = inlined_call_operand.hbm [shape: f32[128,128], index: 3, kind: input, shape index: {}]
  %s4 = inlined_call_operand.vmem [shape: f32[1,128], index: 4, kind: input, shape index: {}]
  %s5 = inlined_call_operand.vmem [shape: f32[8,128], index: 5, kind: input, shape index: {}]
  %s6 = inlined_call_operand.<no memory space> [shape: f32[1,1], index: 6, kind: input, shape index: {}]
  %s7 = inlined_call_operand.vmem [shape: f32[1,128], index: 7, kind: output, shape index: {}]
  %s8 = sld [smem:[#allocation0]]
  $region42: #{feedforward_nn.1} parent=0
    _
  %s10 = ssub.s32 1, %s8
  %s11 = scalar_select 0, %s10, %s8
  %12 = sst [smem:[#allocation2]] %s6
  $region1: #{feedforward_nn.1} parent=0
    #allocation3 [shape = 'u8[65536]{0}', space=vmem, size = 0x10000, scoped, tag = 'input window, operand 3, single buffered']
    #allocation4 [shape = 's32[1]{0}', space=sflag, size = 0x4, scoped, tag = 'scoped memory for feedforward_nn.1']
    %13 = vsyncpa [#allocation4], 0
    // Predicated region
    $region2: #{feedforward_nn.1} parent=1 // pred_check
      _
    $region3: #{feedforward_nn.1} parent=1 // pred_check_branch
      %15 = sbr.rel (0) target = $region5
    $region4: #{feedforward_nn.1} parent=1 // pred_region
      _
    $region5: #{feedforward_nn.1} parent=1 // pred_fallthru
      _
    // Predicated region
    $region6: #{feedforward_nn.1} parent=1 // pred_check
      _
    $region7: #{feedforward_nn.1} parent=1 // pred_check_branch
      %17 = sbr.rel (0) target = $region9
    $region8: #{feedforward_nn.1} parent=1 // pred_region
      _
    $region9: #{feedforward_nn.1} parent=1 // pred_fallthru
      _
    // Predicated region
    $region10: #{feedforward_nn.1} parent=1 // pred_check
      _
    $region11: #{feedforward_nn.1} parent=1 // pred_check_branch
      %19 = sbr.rel (0) target = $region13
    $region12: #{feedforward_nn.1} parent=1 // pred_region
      _
    $region13: #{feedforward_nn.1} parent=1 // pred_fallthru
      _
    // Predicated region
    $region14: #{feedforward_nn.1} parent=1 // pred_check
      _
    $region15: #{feedforward_nn.1} parent=1 // pred_check_branch
      %21 = sbr.rel (0) target = $region17
    $region16: #{feedforward_nn.1} parent=1 // pred_region
      %s23 = ssub.s32 2048, 2048
      %24 = vsyncadd [#allocation4], %s23
      %s25 = sshll.u32 [#allocation3], 4
      %s26 = int_to_ptr.vmem [resolvable:$true] %s25
      %31 = dma.hbm_to_vmem [thread:$0]  %s3, 2048, %s26, [#allocation4], 128, 128, 8
    $region17: #{feedforward_nn.1} parent=1 // pred_fallthru
      _
    // Predicated region
    $region18: #{feedforward_nn.1} parent=1 // pred_check
      _
    $region19: #{feedforward_nn.1} parent=1 // pred_check_branch
      %33 = sbr.rel (0) target = $region21
    $region20: #{feedforward_nn.1} parent=1 // pred_region
      _
    $region21: #{feedforward_nn.1} parent=1 // pred_fallthru
      _
    // Predicated region
    $region22: #{feedforward_nn.1} parent=1 // pred_check
      _
    $region23: #{feedforward_nn.1} parent=1 // pred_check_branch
      %35 = sbr.rel (0) target = $region25
    $region24: #{feedforward_nn.1} parent=1 // pred_region
      _
    $region25: #{feedforward_nn.1} parent=1 // pred_fallthru
      _
    // Predicated region
    $region26: #{feedforward_nn.1} parent=1 // pred_check
      _
    $region27: #{feedforward_nn.1} parent=1 // pred_check_branch
      %37 = sbr.rel (0) target = $region29
    $region28: #{feedforward_nn.1} parent=1 // pred_region
      _
    $region29: #{feedforward_nn.1} parent=1 // pred_fallthru
      _
    // Predicated region
    $region30: #{feedforward_nn.1} parent=1 // pred_check
      _
    $region31: #{feedforward_nn.1} parent=1 // pred_check_branch
      %39 = sbr.rel (0) target = $region33
    $region32: #{feedforward_nn.1} parent=1 // pred_region
      %40 = dma.done [#allocation4], 2048
    $region33: #{feedforward_nn.1} parent=1 // pred_fallthru
      _
    %v41 = vld [vmem:[%s0] sm:$0xff]
    %v42 = vld [vmem:[%s0 + $0x8] sm:$0xff]
    %v43 = vld [vmem:[%s0 + $0x10] sm:$0xff]
    %v44 = vld [vmem:[%s0 + $0x18] sm:$0xff]
    %v45 = vld [vmem:[%s0 + $0x20] sm:$0xff]
    %v46 = vld [vmem:[%s0 + $0x28] sm:$0xff]
    %v47 = vld [vmem:[%s0 + $0x30] sm:$0xff]
    %v48 = vld [vmem:[%s0 + $0x38] sm:$0xff]
    %v49 = vld [vmem:[%s0 + $0x40] sm:$0xff]
    %v50 = vld [vmem:[%s0 + $0x48] sm:$0xff]
    %v51 = vld [vmem:[%s0 + $0x50] sm:$0xff]
    %v52 = vld [vmem:[%s0 + $0x58] sm:$0xff]
    %v53 = vld [vmem:[%s0 + $0x60] sm:$0xff]
    %v54 = vld [vmem:[%s0 + $0x68] sm:$0xff]
    %v55 = vld [vmem:[%s0 + $0x70] sm:$0xff]
    %v56 = vld [vmem:[%s0 + $0x78] sm:$0xff]
    %v57 = vld [vmem:[%s0 + $0x80] sm:$0xff]
    %v58 = vld [vmem:[%s0 + $0x88] sm:$0xff]
    %v59 = vld [vmem:[%s0 + $0x90] sm:$0xff]
    %v60 = vld [vmem:[%s0 + $0x98] sm:$0xff]
    %v61 = vld [vmem:[%s0 + $0xa0] sm:$0xff]
    %v62 = vld [vmem:[%s0 + $0xa8] sm:$0xff]
    %v63 = vld [vmem:[%s0 + $0xb0] sm:$0xff]
    %v64 = vld [vmem:[%s0 + $0xb8] sm:$0xff]
    %v65 = vld [vmem:[%s0 + $0xc0] sm:$0xff]
    %v66 = vld [vmem:[%s0 + $0xc8] sm:$0xff]
    %v67 = vld [vmem:[%s0 + $0xd0] sm:$0xff]
    %v68 = vld [vmem:[%s0 + $0xd8] sm:$0xff]
    %v69 = vld [vmem:[%s0 + $0xe0] sm:$0xff]
    %v70 = vld [vmem:[%s0 + $0xe8] sm:$0xff]
    %v71 = vld [vmem:[%s0 + $0xf0] sm:$0xff]
    %v72 = vld [vmem:[%s0 + $0xf8] sm:$0xff]
    %v73 = vld [vmem:[%s1] sm:$0xff]
    %v74 = vld [vmem:[%s1 + $0x8] sm:$0xff]
    %v75 = vld [vmem:[%s1 + $0x10] sm:$0xff]
    %v76 = vld [vmem:[%s1 + $0x18] sm:$0xff]
    %v77 = vld [vmem:[%s1 + $0x20] sm:$0xff]
    %v78 = vld [vmem:[%s1 + $0x28] sm:$0xff]
    %v79 = vld [vmem:[%s1 + $0x30] sm:$0xff]
    %v80 = vld [vmem:[%s1 + $0x38] sm:$0xff]
    %v81 = vld [vmem:[%s1 + $0x40] sm:$0xff]
    %v82 = vld [vmem:[%s1 + $0x48] sm:$0xff]
    %v83 = vld [vmem:[%s1 + $0x50] sm:$0xff]
    %v84 = vld [vmem:[%s1 + $0x58] sm:$0xff]
    %v85 = vld [vmem:[%s1 + $0x60] sm:$0xff]
    %v86 = vld [vmem:[%s1 + $0x68] sm:$0xff]
    %v87 = vld [vmem:[%s1 + $0x70] sm:$0xff]
    %v88 = vld [vmem:[%s1 + $0x78] sm:$0xff]
    %v89 = vld [vmem:[%s1 + $0x80] sm:$0xff]
    %v90 = vld [vmem:[%s1 + $0x88] sm:$0xff]
    %v91 = vld [vmem:[%s1 + $0x90] sm:$0xff]
    %v92 = vld [vmem:[%s1 + $0x98] sm:$0xff]
    %v93 = vld [vmem:[%s1 + $0xa0] sm:$0xff]
    %v94 = vld [vmem:[%s1 + $0xa8] sm:$0xff]
    %v95 = vld [vmem:[%s1 + $0xb0] sm:$0xff]
    %v96 = vld [vmem:[%s1 + $0xb8] sm:$0xff]
    %v97 = vld [vmem:[%s1 + $0xc0] sm:$0xff]
    %v98 = vld [vmem:[%s1 + $0xc8] sm:$0xff]
    %v99 = vld [vmem:[%s1 + $0xd0] sm:$0xff]
    %v100 = vld [vmem:[%s1 + $0xd8] sm:$0xff]
    %v101 = vld [vmem:[%s1 + $0xe0] sm:$0xf]
    %v102 = vld [vmem:[%s2] sm:$0x1]
    %v104 = vlaneseq
    %v105 = vshrl.u32 %v104, 7
    %v106 = vsub.s32 0, %v105
    %v107 = vrot.slane %v102, %v106
    %vm109 = vcmask 818176
    %v111 = vsel %vm109, %v42, 0
    %v114 = vsel %vm109, %v44, 0
    %v117 = vsel %vm109, %v46, 0
    %v120 = vsel %vm109, %v48, 0
    %v123 = vsel %vm109, %v50, 0
    %v126 = vsel %vm109, %v52, 0
    %v129 = vsel %vm109, %v54, 0
    %v132 = vsel %vm109, %v56, 0
    %v135 = vsel %vm109, %v58, 0
    %v138 = vsel %vm109, %v60, 0
    %v141 = vsel %vm109, %v62, 0
    %v144 = vsel %vm109, %v64, 0
    %v147 = vsel %vm109, %v66, 0
    %v150 = vsel %vm109, %v68, 0
    %v153 = vsel %vm109, %v70, 0
    %v156 = vsel %vm109, %v72, 0
    %vm158 = vcmask 1043456
    %v160 = vsel %vm158, %v101, 0
    %162 = vmatprep.subr.mxu0 0.0
    %163 = vmatpush1.msra.mxu0 %v88
    %164 = vmatprep.subr.mxu0 0.0
    %165 = vmatpush1.msra.mxu0 %v87
    %166 = vmatprep.subr.mxu0 0.0
    %167 = vmatpush1.msra.mxu0 %v86
    %168 = vmatprep.subr.mxu0 0.0
    %169 = vmatpush1.msra.mxu0 %v85
    %170 = vmatprep.subr.mxu0 0.0
    %171 = vmatpush1.msra.mxu0 %v84
    %172 = vmatprep.subr.mxu0 0.0
    %173 = vmatpush1.msra.mxu0 %v83
    %174 = vmatprep.subr.mxu0 0.0
    %175 = vmatpush1.msra.mxu0 %v82
    %176 = vmatprep.subr.mxu0 0.0
    %177 = vmatpush1.msra.mxu0 %v81
    %178 = vmatprep.subr.mxu0 0.0
    %179 = vmatpush1.msra.mxu0 %v80
    %180 = vmatprep.subr.mxu0 0.0
    %181 = vmatpush1.msra.mxu0 %v79
    %182 = vmatprep.subr.mxu0 0.0
    %183 = vmatpush1.msra.mxu0 %v78
    %184 = vmatprep.subr.mxu0 0.0
    %185 = vmatpush1.msra.mxu0 %v77
    %186 = vmatprep.subr.mxu0 0.0
    %187 = vmatpush1.msra.mxu0 %v76
    %188 = vmatprep.subr.mxu0 0.0
    %189 = vmatpush1.msra.mxu0 %v75
    %190 = vmatprep.subr.mxu0 0.0
    %191 = vmatpush1.msra.mxu0 %v74
    %192 = vmatprep.subr.mxu0 0.0
    %193 = vmatpush1.msra.mxu0 %v73
    %194 = vmatprep.subr.mxu0 0.0
    %195 = vmatpush2.msra.mxu0 0.0
    %196 = vmatprep.subr.mxu0 0.0
    %197 = vmatpush2.msra.mxu0 0.0
    %198 = vmatprep.subr.mxu0 0.0
    %199 = vmatpush2.msra.mxu0 0.0
    %200 = vmatprep.subr.mxu0 0.0
    %201 = vmatpush2.msra.mxu0 %v160
    %202 = vmatprep.subr.mxu0 0.0
    %203 = vmatpush2.msra.mxu0 %v100
    %204 = vmatprep.subr.mxu0 0.0
    %205 = vmatpush2.msra.mxu0 %v99
    %206 = vmatprep.subr.mxu0 0.0
    %207 = vmatpush2.msra.mxu0 %v98
    %208 = vmatprep.subr.mxu0 0.0
    %209 = vmatpush2.msra.mxu0 %v97
    %210 = vmatprep.subr.mxu0 0.0
    %211 = vmatpush2.msra.mxu0 %v96
    %212 = vmatprep.subr.mxu0 0.0
    %213 = vmatpush2.msra.mxu0 %v95
    %214 = vmatprep.subr.mxu0 0.0
    %215 = vmatpush2.msra.mxu0 %v94
    %216 = vmatprep.subr.mxu0 0.0
    %217 = vmatpush2.msra.mxu0 %v93
    %218 = vmatprep.subr.mxu0 0.0
    %219 = vmatpush2.msra.mxu0 %v92
    %220 = vmatprep.subr.mxu0 0.0
    %221 = vmatpush2.msra.mxu0 %v91
    %222 = vmatprep.subr.mxu0 0.0
    %223 = vmatpush2.msra.mxu0 %v90
    %224 = vmatprep.subr.mxu0 0.0
    %225 = vmatpush2.msra.mxu0 %v89
    %226 = vmatprep.mubr.f32.mxu0 %v111
    %227 = vmatmul.mubr.f32.gmra.mxu0 %v41
    %v228 = vpop.f32.mrf.mxu0
    %v229 = vadd.f32 %v107, %v228
    %v230 = vpop.f32.mrf.mxu0
    %231 = vmatprep.mubr.f32.mxu0 %v114
    %232 = vmatmul.mubr.f32.gmra.mxu0 %v43
    %v233 = vpop.f32.mrf.mxu0
    %v234 = vadd.f32 %v107, %v233
    %v235 = vpop.f32.mrf.mxu0
    %236 = vmatprep.mubr.f32.mxu0 %v117
    %237 = vmatmul.mubr.f32.gmra.mxu0 %v45
    %v238 = vpop.f32.mrf.mxu0
    %v239 = vadd.f32 %v107, %v238
    %v240 = vpop.f32.mrf.mxu0
    %241 = vmatprep.mubr.f32.mxu0 %v120
    %242 = vmatmul.mubr.f32.gmra.mxu0 %v47
    %v243 = vpop.f32.mrf.mxu0
    %v244 = vadd.f32 %v107, %v243
    %v245 = vpop.f32.mrf.mxu0
    %246 = vmatprep.mubr.f32.mxu0 %v123
    %247 = vmatmul.mubr.f32.gmra.mxu0 %v49
    %v248 = vpop.f32.mrf.mxu0
    %v249 = vadd.f32 %v107, %v248
    %v250 = vpop.f32.mrf.mxu0
    %251 = vmatprep.mubr.f32.mxu0 %v126
    %252 = vmatmul.mubr.f32.gmra.mxu0 %v51
    %v253 = vpop.f32.mrf.mxu0
    %v254 = vadd.f32 %v107, %v253
    %v255 = vpop.f32.mrf.mxu0
    %256 = vmatprep.mubr.f32.mxu0 %v129
    %257 = vmatmul.mubr.f32.gmra.mxu0 %v53
    %v258 = vpop.f32.mrf.mxu0
    %v259 = vadd.f32 %v107, %v258
    %v260 = vpop.f32.mrf.mxu0
    %261 = vmatprep.mubr.f32.mxu0 %v132
    %262 = vmatmul.mubr.f32.gmra.mxu0 %v55
    %v263 = vpop.f32.mrf.mxu0
    %v264 = vadd.f32 %v107, %v263
    %v265 = vpop.f32.mrf.mxu0
    %266 = vmatprep.mubr.f32.mxu0 %v135
    %267 = vmatmul.mubr.f32.gmra.mxu0 %v57
    %v268 = vpop.f32.mrf.mxu0
    %v269 = vadd.f32 %v107, %v268
    %v270 = vpop.f32.mrf.mxu0
    %271 = vmatprep.mubr.f32.mxu0 %v138
    %272 = vmatmul.mubr.f32.gmra.mxu0 %v59
    %v273 = vpop.f32.mrf.mxu0
    %v274 = vadd.f32 %v107, %v273
    %v275 = vpop.f32.mrf.mxu0
    %276 = vmatprep.mubr.f32.mxu0 %v141
    %277 = vmatmul.mubr.f32.gmra.mxu0 %v61
    %v278 = vpop.f32.mrf.mxu0
    %v279 = vadd.f32 %v107, %v278
    %v280 = vpop.f32.mrf.mxu0
    %281 = vmatprep.mubr.f32.mxu0 %v144
    %282 = vmatmul.mubr.f32.gmra.mxu0 %v63
    %v283 = vpop.f32.mrf.mxu0
    %v284 = vadd.f32 %v107, %v283
    %v285 = vpop.f32.mrf.mxu0
    %286 = vmatprep.mubr.f32.mxu0 %v147
    %287 = vmatmul.mubr.f32.gmra.mxu0 %v65
    %v288 = vpop.f32.mrf.mxu0
    %v289 = vadd.f32 %v107, %v288
    %v290 = vpop.f32.mrf.mxu0
    %291 = vmatprep.mubr.f32.mxu0 %v150
    %292 = vmatmul.mubr.f32.gmra.mxu0 %v67
    %v293 = vpop.f32.mrf.mxu0
    %v294 = vadd.f32 %v107, %v293
    %v295 = vpop.f32.mrf.mxu0
    %296 = vmatprep.mubr.f32.mxu0 %v153
    %297 = vmatmul.mubr.f32.gmra.mxu0 %v69
    %v298 = vpop.f32.mrf.mxu0
    %v299 = vadd.f32 %v107, %v298
    %v300 = vpop.f32.mrf.mxu0
    %301 = vmatprep.mubr.f32.mxu0 %v156
    %302 = vmatmul.mubr.f32.gmra.mxu0 %v71
    %v303 = vpop.f32.mrf.mxu0
    %v304 = vadd.f32 %v107, %v303
    %v305 = vpop.f32.mrf.mxu0
    %306 = vdwg.mxu0
    %vm307 = vcmp.gt.f32.partialorder %v229, 0.0
    %vm308 = vcmp.gt.f32.partialorder %v234, 0.0
    %vm309 = vcmp.gt.f32.partialorder %v239, 0.0
    %vm310 = vcmp.gt.f32.partialorder %v244, 0.0
    %vm311 = vcmp.gt.f32.partialorder %v249, 0.0
    %vm312 = vcmp.gt.f32.partialorder %v254, 0.0
    %vm313 = vcmp.gt.f32.partialorder %v259, 0.0
    %vm314 = vcmp.gt.f32.partialorder %v264, 0.0
    %vm315 = vcmp.gt.f32.partialorder %v269, 0.0
    %vm316 = vcmp.gt.f32.partialorder %v274, 0.0
    %vm317 = vcmp.gt.f32.partialorder %v279, 0.0
    %vm318 = vcmp.gt.f32.partialorder %v284, 0.0
    %vm319 = vcmp.gt.f32.partialorder %v289, 0.0
    %vm320 = vcmp.gt.f32.partialorder %v294, 0.0
    %vm321 = vcmp.gt.f32.partialorder %v299, 0.0
    %vm322 = vcmp.gt.f32.partialorder %v304, 0.0
    %v323 = vmul.f32 %v229, 0.01
    %v324 = vmul.f32 %v234, 0.01
    %v325 = vmul.f32 %v239, 0.01
    %v326 = vmul.f32 %v244, 0.01
    %v327 = vmul.f32 %v249, 0.01
    %v328 = vmul.f32 %v254, 0.01
    %v329 = vmul.f32 %v259, 0.01
    %v330 = vmul.f32 %v264, 0.01
    %v331 = vmul.f32 %v269, 0.01
    %v332 = vmul.f32 %v274, 0.01
    %v333 = vmul.f32 %v279, 0.01
    %v334 = vmul.f32 %v284, 0.01
    %v335 = vmul.f32 %v289, 0.01
    %v336 = vmul.f32 %v294, 0.01
    %v337 = vmul.f32 %v299, 0.01
    %v338 = vmul.f32 %v304, 0.01
    %v339 = vsel %vm307, %v229, %v323
    %v340 = vsel %vm308, %v234, %v324
    %v341 = vsel %vm309, %v239, %v325
    %v342 = vsel %vm310, %v244, %v326
    %v343 = vsel %vm311, %v249, %v327
    %v344 = vsel %vm312, %v254, %v328
    %v345 = vsel %vm313, %v259, %v329
    %v346 = vsel %vm314, %v264, %v330
    %v347 = vsel %vm315, %v269, %v331
    %v348 = vsel %vm316, %v274, %v332
    %v349 = vsel %vm317, %v279, %v333
    %v350 = vsel %vm318, %v284, %v334
    %v351 = vsel %vm319, %v289, %v335
    %v352 = vsel %vm320, %v294, %v336
    %v353 = vsel %vm321, %v299, %v337
    %v354 = vsel %vm322, %v304, %v338
    %v355 = vld [vmem:[#allocation3] sm:$0xff]
    %v356 = vld [vmem:[#allocation3 + $0x8] sm:$0xff]
    %v357 = vld [vmem:[#allocation3 + $0x10] sm:$0xff]
    %v358 = vld [vmem:[#allocation3 + $0x18] sm:$0xff]
    %v359 = vld [vmem:[#allocation3 + $0x20] sm:$0xff]
    %v360 = vld [vmem:[#allocation3 + $0x28] sm:$0xff]
    %v361 = vld [vmem:[#allocation3 + $0x30] sm:$0xff]
    %v362 = vld [vmem:[#allocation3 + $0x38] sm:$0xff]
    %v363 = vld [vmem:[#allocation3 + $0x40] sm:$0xff]
    %v364 = vld [vmem:[#allocation3 + $0x48] sm:$0xff]
    %v365 = vld [vmem:[#allocation3 + $0x50] sm:$0xff]
    %v366 = vld [vmem:[#allocation3 + $0x58] sm:$0xff]
    %v367 = vld [vmem:[#allocation3 + $0x60] sm:$0xff]
    %v368 = vld [vmem:[#allocation3 + $0x68] sm:$0xff]
    %v369 = vld [vmem:[#allocation3 + $0x70] sm:$0xff]
    %v370 = vld [vmem:[#allocation3 + $0x78] sm:$0xff]
    %v371 = vld [vmem:[%s4] sm:$0x1]
    %v373 = vlaneseq
    %v374 = vshrl.u32 %v373, 7
    %v375 = vsub.s32 0, %v374
    %v376 = vrot.slane %v371, %v375
    %378 = vmatprep.subr.mxu0 0.0
    %379 = vmatpush1.msra.mxu0 %v370
    %380 = vmatprep.subr.mxu0 0.0
    %381 = vmatpush1.msra.mxu0 %v369
    %382 = vmatprep.subr.mxu0 0.0
    %383 = vmatpush1.msra.mxu0 %v368
    %384 = vmatprep.subr.mxu0 0.0
    %385 = vmatpush1.msra.mxu0 %v367
    %386 = vmatprep.subr.mxu0 0.0
    %387 = vmatpush1.msra.mxu0 %v366
    %388 = vmatprep.subr.mxu0 0.0
    %389 = vmatpush1.msra.mxu0 %v365
    %390 = vmatprep.subr.mxu0 0.0
    %391 = vmatpush1.msra.mxu0 %v364
    %392 = vmatprep.subr.mxu0 0.0
    %393 = vmatpush1.msra.mxu0 %v363
    %394 = vmatprep.subr.mxu0 0.0
    %395 = vmatpush1.msra.mxu0 %v362
    %396 = vmatprep.subr.mxu0 0.0
    %397 = vmatpush1.msra.mxu0 %v361
    %398 = vmatprep.subr.mxu0 0.0
    %399 = vmatpush1.msra.mxu0 %v360
    %400 = vmatprep.subr.mxu0 0.0
    %401 = vmatpush1.msra.mxu0 %v359
    %402 = vmatprep.subr.mxu0 0.0
    %403 = vmatpush1.msra.mxu0 %v358
    %404 = vmatprep.subr.mxu0 0.0
    %405 = vmatpush1.msra.mxu0 %v357
    %406 = vmatprep.subr.mxu0 0.0
    %407 = vmatpush1.msra.mxu0 %v356
    %408 = vmatprep.subr.mxu0 0.0
    %409 = vmatpush1.msra.mxu0 %v355
    %410 = vmatprep.subr.mxu0 0.0
    %411 = vmatpush2.msra.mxu0 0.0
    %412 = vmatprep.subr.mxu0 0.0
    %413 = vmatpush2.msra.mxu0 0.0
    %414 = vmatprep.subr.mxu0 0.0
    %415 = vmatpush2.msra.mxu0 0.0
    %416 = vmatprep.subr.mxu0 0.0
    %417 = vmatpush2.msra.mxu0 0.0
    %418 = vmatprep.subr.mxu0 0.0
    %419 = vmatpush2.msra.mxu0 0.0
    %420 = vmatprep.subr.mxu0 0.0
    %421 = vmatpush2.msra.mxu0 0.0
    %422 = vmatprep.subr.mxu0 0.0
    %423 = vmatpush2.msra.mxu0 0.0
    %424 = vmatprep.subr.mxu0 0.0
    %425 = vmatpush2.msra.mxu0 0.0
    %426 = vmatprep.subr.mxu0 0.0
    %427 = vmatpush2.msra.mxu0 0.0
    %428 = vmatprep.subr.mxu0 0.0
    %429 = vmatpush2.msra.mxu0 0.0
    %430 = vmatprep.subr.mxu0 0.0
    %431 = vmatpush2.msra.mxu0 0.0
    %432 = vmatprep.subr.mxu0 0.0
    %433 = vmatpush2.msra.mxu0 0.0
    %434 = vmatprep.subr.mxu0 0.0
    %435 = vmatpush2.msra.mxu0 0.0
    %436 = vmatprep.subr.mxu0 0.0
    %437 = vmatpush2.msra.mxu0 0.0
    %438 = vmatprep.subr.mxu0 0.0
    %439 = vmatpush2.msra.mxu0 0.0
    %440 = vmatprep.subr.mxu0 0.0
    %441 = vmatpush2.msra.mxu0 0.0
    %442 = vmatprep.mubr.f32.mxu0 0.0
    %443 = vmatmul.mubr.f32.gmra.mxu0 %v339
    %v444 = vpop.f32.mrf.mxu0
    %v445 = vadd.f32 %v376, %v444
    %v446 = vpop.f32.mrf.mxu0
    %447 = vmatprep.mubr.f32.mxu0 0.0
    %448 = vmatmul.mubr.f32.gmra.mxu0 %v340
    %v449 = vpop.f32.mrf.mxu0
    %v450 = vadd.f32 %v376, %v449
    %v451 = vpop.f32.mrf.mxu0
    %452 = vmatprep.mubr.f32.mxu0 0.0
    %453 = vmatmul.mubr.f32.gmra.mxu0 %v341
    %v454 = vpop.f32.mrf.mxu0
    %v455 = vadd.f32 %v376, %v454
    %v456 = vpop.f32.mrf.mxu0
    %457 = vmatprep.mubr.f32.mxu0 0.0
    %458 = vmatmul.mubr.f32.gmra.mxu0 %v342
    %v459 = vpop.f32.mrf.mxu0
    %v460 = vadd.f32 %v376, %v459
    %v461 = vpop.f32.mrf.mxu0
    %462 = vmatprep.mubr.f32.mxu0 0.0
    %463 = vmatmul.mubr.f32.gmra.mxu0 %v343
    %v464 = vpop.f32.mrf.mxu0
    %v465 = vadd.f32 %v376, %v464
    %v466 = vpop.f32.mrf.mxu0
    %467 = vmatprep.mubr.f32.mxu0 0.0
    %468 = vmatmul.mubr.f32.gmra.mxu0 %v344
    %v469 = vpop.f32.mrf.mxu0
    %v470 = vadd.f32 %v376, %v469
    %v471 = vpop.f32.mrf.mxu0
    %472 = vmatprep.mubr.f32.mxu0 0.0
    %473 = vmatmul.mubr.f32.gmra.mxu0 %v345
    %v474 = vpop.f32.mrf.mxu0
    %v475 = vadd.f32 %v376, %v474
    %v476 = vpop.f32.mrf.mxu0
    %477 = vmatprep.mubr.f32.mxu0 0.0
    %478 = vmatmul.mubr.f32.gmra.mxu0 %v346
    %v479 = vpop.f32.mrf.mxu0
    %v480 = vadd.f32 %v376, %v479
    %v481 = vpop.f32.mrf.mxu0
    %482 = vmatprep.mubr.f32.mxu0 0.0
    %483 = vmatmul.mubr.f32.gmra.mxu0 %v347
    %v484 = vpop.f32.mrf.mxu0
    %v485 = vadd.f32 %v376, %v484
    %v486 = vpop.f32.mrf.mxu0
    %487 = vmatprep.mubr.f32.mxu0 0.0
    %488 = vmatmul.mubr.f32.gmra.mxu0 %v348
    %v489 = vpop.f32.mrf.mxu0
    %v490 = vadd.f32 %v376, %v489
    %v491 = vpop.f32.mrf.mxu0
    %492 = vmatprep.mubr.f32.mxu0 0.0
    %493 = vmatmul.mubr.f32.gmra.mxu0 %v349
    %v494 = vpop.f32.mrf.mxu0
    %v495 = vadd.f32 %v376, %v494
    %v496 = vpop.f32.mrf.mxu0
    %497 = vmatprep.mubr.f32.mxu0 0.0
    %498 = vmatmul.mubr.f32.gmra.mxu0 %v350
    %v499 = vpop.f32.mrf.mxu0
    %v500 = vadd.f32 %v376, %v499
    %v501 = vpop.f32.mrf.mxu0
    %502 = vmatprep.mubr.f32.mxu0 0.0
    %503 = vmatmul.mubr.f32.gmra.mxu0 %v351
    %v504 = vpop.f32.mrf.mxu0
    %v505 = vadd.f32 %v376, %v504
    %v506 = vpop.f32.mrf.mxu0
    %507 = vmatprep.mubr.f32.mxu0 0.0
    %508 = vmatmul.mubr.f32.gmra.mxu0 %v352
    %v509 = vpop.f32.mrf.mxu0
    %v510 = vadd.f32 %v376, %v509
    %v511 = vpop.f32.mrf.mxu0
    %512 = vmatprep.mubr.f32.mxu0 0.0
    %513 = vmatmul.mubr.f32.gmra.mxu0 %v353
    %v514 = vpop.f32.mrf.mxu0
    %v515 = vadd.f32 %v376, %v514
    %v516 = vpop.f32.mrf.mxu0
    %517 = vmatprep.mubr.f32.mxu0 0.0
    %518 = vmatmul.mubr.f32.gmra.mxu0 %v354
    %v519 = vpop.f32.mrf.mxu0
    %v520 = vadd.f32 %v376, %v519
    %v521 = vpop.f32.mrf.mxu0
    %522 = vdwg.mxu0
    %vm523 = vcmp.gt.f32.partialorder %v445, 0.0
    %vm524 = vcmp.gt.f32.partialorder %v450, 0.0
    %vm525 = vcmp.gt.f32.partialorder %v455, 0.0
    %vm526 = vcmp.gt.f32.partialorder %v460, 0.0
    %vm527 = vcmp.gt.f32.partialorder %v465, 0.0
    %vm528 = vcmp.gt.f32.partialorder %v470, 0.0
    %vm529 = vcmp.gt.f32.partialorder %v475, 0.0
    %vm530 = vcmp.gt.f32.partialorder %v480, 0.0
    %vm531 = vcmp.gt.f32.partialorder %v485, 0.0
    %vm532 = vcmp.gt.f32.partialorder %v490, 0.0
    %vm533 = vcmp.gt.f32.partialorder %v495, 0.0
    %vm534 = vcmp.gt.f32.partialorder %v500, 0.0
    %vm535 = vcmp.gt.f32.partialorder %v505, 0.0
    %vm536 = vcmp.gt.f32.partialorder %v510, 0.0
    %vm537 = vcmp.gt.f32.partialorder %v515, 0.0
    %vm538 = vcmp.gt.f32.partialorder %v520, 0.0
    %v539 = vmul.f32 %v445, 0.01
    %v540 = vmul.f32 %v450, 0.01
    %v541 = vmul.f32 %v455, 0.01
    %v542 = vmul.f32 %v460, 0.01
    %v543 = vmul.f32 %v465, 0.01
    %v544 = vmul.f32 %v470, 0.01
    %v545 = vmul.f32 %v475, 0.01
    %v546 = vmul.f32 %v480, 0.01
    %v547 = vmul.f32 %v485, 0.01
    %v548 = vmul.f32 %v490, 0.01
    %v549 = vmul.f32 %v495, 0.01
    %v550 = vmul.f32 %v500, 0.01
    %v551 = vmul.f32 %v505, 0.01
    %v552 = vmul.f32 %v510, 0.01
    %v553 = vmul.f32 %v515, 0.01
    %v554 = vmul.f32 %v520, 0.01
    %v555 = vsel %vm523, %v445, %v539
    %v556 = vsel %vm524, %v450, %v540
    %v557 = vsel %vm525, %v455, %v541
    %v558 = vsel %vm526, %v460, %v542
    %v559 = vsel %vm527, %v465, %v543
    %v560 = vsel %vm528, %v470, %v544
    %v561 = vsel %vm529, %v475, %v545
    %v562 = vsel %vm530, %v480, %v546
    %v563 = vsel %vm531, %v485, %v547
    %v564 = vsel %vm532, %v490, %v548
    %v565 = vsel %vm533, %v495, %v549
    %v566 = vsel %vm534, %v500, %v550
    %v567 = vsel %vm535, %v505, %v551
    %v568 = vsel %vm536, %v510, %v552
    %v569 = vsel %vm537, %v515, %v553
    %v570 = vsel %vm538, %v520, %v554
    %v571 = vld [vmem:[%s5] sm:$0xff]
    %572 = vmatprep.subr.mxu0 0.0
    %573 = vmatpush1.xpose.msra.mxu0 %v570
    %574 = vmatprep.subr.mxu0 0.0
    %575 = vmatpush1.xpose.msra.mxu0 %v569
    %576 = vmatprep.subr.mxu0 0.0
    %577 = vmatpush1.xpose.msra.mxu0 %v568
    %578 = vmatprep.subr.mxu0 0.0
    %579 = vmatpush1.xpose.msra.mxu0 %v567
    %580 = vmatprep.subr.mxu0 0.0
    %581 = vmatpush1.xpose.msra.mxu0 %v566
    %582 = vmatprep.subr.mxu0 0.0
    %583 = vmatpush1.xpose.msra.mxu0 %v565
    %584 = vmatprep.subr.mxu0 0.0
    %585 = vmatpush1.xpose.msra.mxu0 %v564
    %586 = vmatprep.subr.mxu0 0.0
    %587 = vmatpush1.xpose.msra.mxu0 %v563
    %588 = vmatprep.subr.mxu0 0.0
    %589 = vmatpush1.xpose.msra.mxu0 %v562
    %590 = vmatprep.subr.mxu0 0.0
    %591 = vmatpush1.xpose.msra.mxu0 %v561
    %592 = vmatprep.subr.mxu0 0.0
    %593 = vmatpush1.xpose.msra.mxu0 %v560
    %594 = vmatprep.subr.mxu0 0.0
    %595 = vmatpush1.xpose.msra.mxu0 %v559
    %596 = vmatprep.subr.mxu0 0.0
    %597 = vmatpush1.xpose.msra.mxu0 %v558
    %598 = vmatprep.subr.mxu0 0.0
    %599 = vmatpush1.xpose.msra.mxu0 %v557
    %600 = vmatprep.subr.mxu0 0.0
    %601 = vmatpush1.xpose.msra.mxu0 %v556
    %602 = vmatprep.subr.mxu0 0.0
    %603 = vmatpush1.xpose.msra.mxu0 %v555
    %604 = vmatprep.subr.mxu0 0.0
    %605 = vmatpush2.xpose.msra.mxu0 0.0
    %606 = vmatprep.subr.mxu0 0.0
    %607 = vmatpush2.xpose.msra.mxu0 0.0
    %608 = vmatprep.subr.mxu0 0.0
    %609 = vmatpush2.xpose.msra.mxu0 0.0
    %610 = vmatprep.subr.mxu0 0.0
    %611 = vmatpush2.xpose.msra.mxu0 0.0
    %612 = vmatprep.subr.mxu0 0.0
    %613 = vmatpush2.xpose.msra.mxu0 0.0
    %614 = vmatprep.subr.mxu0 0.0
    %615 = vmatpush2.xpose.msra.mxu0 0.0
    %616 = vmatprep.subr.mxu0 0.0
    %617 = vmatpush2.xpose.msra.mxu0 0.0
    %618 = vmatprep.subr.mxu0 0.0
    %619 = vmatpush2.xpose.msra.mxu0 0.0
    %620 = vmatprep.subr.mxu0 0.0
    %621 = vmatpush2.xpose.msra.mxu0 0.0
    %622 = vmatprep.subr.mxu0 0.0
    %623 = vmatpush2.xpose.msra.mxu0 0.0
    %624 = vmatprep.subr.mxu0 0.0
    %625 = vmatpush2.xpose.msra.mxu0 0.0
    %626 = vmatprep.subr.mxu0 0.0
    %627 = vmatpush2.xpose.msra.mxu0 0.0
    %628 = vmatprep.subr.mxu0 0.0
    %629 = vmatpush2.xpose.msra.mxu0 0.0
    %630 = vmatprep.subr.mxu0 0.0
    %631 = vmatpush2.xpose.msra.mxu0 0.0
    %632 = vmatprep.subr.mxu0 0.0
    %633 = vmatpush2.xpose.msra.mxu0 0.0
    %634 = vmatprep.subr.mxu0 0.0
    %635 = vmatpush2.xpose.msra.mxu0 0.0
    %636 = vmatprep.mubr.f32.mxu0 0.0
    %637 = vmatmul.mubr.f32.gmra.mxu0 %v571
    %v638 = vpop.f32.mrf.mxu0
    %v639 = vadd.f32 0.0, %v638
    %v640 = vpop.f32.mrf.mxu0
    %641 = vdwg.mxu0
    %s642 = sld [smem:[#allocation2]]
    %v643 = vstv %s642
    %v644 = vadd.f32 %v639, %v643
    %645 = vst [vmem:[%s7] sm:$0x1] %v644
    // Predicated region
    $region34: #{feedforward_nn.1} parent=1 // pred_check
      _
    $region35: #{feedforward_nn.1} parent=1 // pred_check_branch
      %647 = sbr.rel (0) target = $region37
    $region36: #{feedforward_nn.1} parent=1 // pred_region
      _
    $region37: #{feedforward_nn.1} parent=1 // pred_fallthru
      _
    // Predicated region
    $region38: #{feedforward_nn.1} parent=1 // pred_check
      _
    $region39: #{feedforward_nn.1} parent=1 // pred_check_branch
      %649 = sbr.rel (0) target = $region41
    $region40: #{feedforward_nn.1} parent=1 // pred_region
      _
    $region41: #{feedforward_nn.1} parent=1 // pred_fallthru
      _
    %650 = vsyncpa [#allocation4], 1

</llo_original>
